<compile_context>
chip_gen: v7x
topology: tpu7x:2x2x1
jax: 0.10.0
libtpu: 0.0.40
codegen_flags: <defaults>
</compile_context>

<pallas_src>
import functools

import numpy as np
import jax
import jax.numpy as jnp
from jax.experimental import pallas as pl
from jax.experimental.pallas import tpu as pltpu

_LANE = 128


def _soft_gbm_kernel(x_ref, w_ref, b_ref, wr_ref, br_ref, mb_ref, phi_ref, out_ref,
                     *, shrinkage_rate):
    x = x_ref[...]                                     # (Bb, F), compute dtype (bf16 by default)

    # 1) Internal-node logits for ALL trees in one MXU matmul (f32 accumulate).
    logits = jnp.dot(x, w_ref[...], preferred_element_type=jnp.float32) + b_ref[...]   # (Bb, T*I)

    # 2) Per-leaf "right turn" logit sums: Rb is folded into the weights wrapper-side, so this
    #    is just a second x-contraction on the MXU (no O(T^2) routing dot, no Rb in VMEM).
    right = jnp.dot(x, wr_ref[...], preferred_element_type=jnp.float32) + br_ref[...]  # (Bb, T*L)

    # 3) One softplus per internal-node logit (EUP exp/log), then
    #      log_path = (logits @ Rb) - (softplus(logits) @ Mb) = right - sp @ Mb.
    #    (log(1 + exp(-|z|)) kept rather than log1p: same EUP cost, negligible precision delta.)
    sp = jnp.maximum(logits, 0.0) + jnp.log(1.0 + jnp.exp(-jnp.abs(logits)))            # (Bb, T*I)
    log_path = right - jnp.dot(sp.astype(mb_ref.dtype), mb_ref[...],
                               preferred_element_type=jnp.float32)                      # (Bb, T*L)
    path_prob = jnp.exp(log_path)

    # 4) Sum over all leaves of all trees in one contraction; phi is lane-padded so the final
    #    store is a full-width unmasked vst.  Shrinkage applied once.
    pred = jnp.dot(path_prob.astype(phi_ref.dtype), phi_ref[...],
                   preferred_element_type=jnp.float32)                                  # (Bb, P_pad)
    out_ref[...] = (shrinkage_rate * pred).astype(out_ref.dtype)


def _routing_matrices(depth):
    """Static right/left indicator matrices for a full binary tree (heap order)."""
    num_internal = 2 ** depth - 1
    num_leaves = 2 ** depth
    R = np.zeros((num_internal, num_leaves), np.float32)
    L = np.zeros((num_internal, num_leaves), np.float32)
    for leaf in range(num_leaves):
        for d in range(depth):
            node = (2 ** d - 1) + (leaf >> (depth - d))     # heap index of node at depth d
            bit = (leaf >> (depth - d - 1)) & 1             # 1 -> right child (prob p), 0 -> left
            if bit:
                R[node, leaf] = 1.0
            else:
                L[node, leaf] = 1.0
    return R, L


def _working_set_bytes(block_b, F, TI, TL, P_pad, cd_bytes):
    """Rough VMEM working set for one batch block (default double-buffered pipeline)."""
    params = (F * TI + F * TL + TI * TL + TL * P_pad) * cd_bytes + (TI + TL) * 4
    io = block_b * F * cd_bytes + block_b * P_pad * 4
    interm = block_b * (2 * TI + 3 * TL) * 4 + block_b * (TI + TL) * cd_bytes
    return 2 * (params + io) + interm


def _pick_block_b(B, F, TI, TL, P_pad, cd_bytes,
                  min_block=256, max_block=1024, budget=48 << 20):
    """8-aligned batch tile: >=2 grid steps when B permits (v7x has 2 TCs), VMEM-bounded."""
    if B <= min_block:
        block_b = B
    else:
        half = -(-B // 2)
        half = -(-half // 8) * 8
        block_b = max(min_block, min(half, max_block))
    while block_b > 8 and _working_set_bytes(block_b, F, TI, TL, P_pad, cd_bytes) > budget:
        block_b = max(8, ((block_b // 2) + 7) // 8 * 8)
    return block_b


def soft_gbm_forward(x, W, bias, phi, shrinkage_rate, depth, param_dtype=jnp.bfloat16):
    T, I, F = W.shape
    _, Lv, P = phi.shape
    B = x.shape[0]
    TI, TL = T * I, T * Lv
    P_pad = -(-P // _LANE) * _LANE            # lane-dense output; sliced back to P below

    # ---- wrapper-side parameter packing (done once; layout + parameter-only folds) ----------
    w_flat = jnp.transpose(W, (2, 0, 1)).reshape(F, TI).astype(jnp.float32)  # col t*I+i = W[t,i,:]
    b_flat = bias.reshape(1, TI).astype(jnp.float32)                         # entry t*I+i
    phi_flat = phi.reshape(TL, P).astype(jnp.float32)                        # row t*L+l

    R, L = _routing_matrices(depth)
    eyeT = np.eye(T, dtype=np.float32)
    Rb = np.kron(eyeT, R)                                  # (TI, TL) block-diag right indicators
    Mb = jnp.asarray(Rb + np.kron(eyeT, L))                # path membership (0/1; exact in bf16)
    Rb = jnp.asarray(Rb)

    # Fold the right-routing dot into the dense layer: logits @ Rb == x @ W_R + b_R.
    W_R = jnp.dot(w_flat, Rb, precision=jax.lax.Precision.HIGHEST)           # (F, TL)
    b_R = jnp.dot(b_flat, Rb, precision=jax.lax.Precision.HIGHEST)           # (1, TL)
    phi_pad = jnp.pad(phi_flat, ((0, 0), (0, P_pad - P)))                    # (TL, P_pad)

    cd = jnp.dtype(param_dtype)
    cd_bytes = cd.itemsize
    x_k = x.astype(cd)
    w_k = w_flat.astype(cd)
    wr_k = W_R.astype(cd)
    mb_k = Mb.astype(cd)
    phi_k = phi_pad.astype(cd)

    block_b = _pick_block_b(B, F, TI, TL, P_pad, cd_bytes)
    grid_b = pl.cdiv(B, block_b)
    vmem_limit = int(min(64 << 20,
                         max(32 << 20,
                             _working_set_bytes(block_b, F, TI, TL, P_pad, cd_bytes) * 5 // 4)))

    kernel = functools.partial(_soft_gbm_kernel, shrinkage_rate=float(shrinkage_rate))

    # TODO(synk): mark the grid-invariant parameter specs pipeline_mode=pl.Buffered(1) (single
    # buffer) once confirmed supported on the target jax build; halves their VMEM footprint,
    # which matters on v7x's 64 MiB at large tree counts, not at this demo size.
    out = pl.pallas_call(
        kernel,
        out_shape=jax.ShapeDtypeStruct((B, P_pad), jnp.float32),
        grid=(grid_b,),
        in_specs=[
            pl.BlockSpec((block_b, F), lambda b: (b, 0)),    # x  (batch-tiled, streamed)
            pl.BlockSpec((F, TI), lambda b: (0, 0)),         # fused dense weights
            pl.BlockSpec((1, TI), lambda b: (0, 0)),         # fused dense biases (f32)
            pl.BlockSpec((F, TL), lambda b: (0, 0)),         # right-routing folded weights
            pl.BlockSpec((1, TL), lambda b: (0, 0)),         # right-routing folded biases (f32)
            pl.BlockSpec((TI, TL), lambda b: (0, 0)),        # path-membership matrix Mb
            pl.BlockSpec((TL, P_pad), lambda b: (0, 0)),     # leaf values (lane-padded)
        ],
        out_specs=pl.BlockSpec((block_b, P_pad), lambda b: (b, 0)),
        compiler_params=pltpu.CompilerParams(
            dimension_semantics=("parallel",),
            vmem_limit_bytes=vmem_limit),
    )(x_k, w_k, b_flat, wr_k, b_R, mb_k, phi_k)

    return out[:, :P]


def soft_gbm_reference(x, W, bias, phi, shrinkage_rate, depth):
    """Pure-JAX reference mirroring the PyTorch recursion (direct products, no log-space)."""
    T, I, F = W.shape
    Lv = phi.shape[1]
    pred = jnp.zeros((x.shape[0], phi.shape[2]), jnp.float32)
    for t in range(T):
        p = jax.nn.sigmoid(x @ W[t].T + bias[t, 0])          # (B, I)
        for leaf in range(Lv):
            pp = jnp.ones((x.shape[0], 1), jnp.float32)
            for d in range(depth):
                node = (2 ** d - 1) + (leaf >> (depth - d))
                bit = (leaf >> (depth - d - 1)) & 1
                p_i = p[:, node:node + 1]
                pp = pp * (p_i if bit else (1.0 - p_i))
            pred = pred + shrinkage_rate * pp * phi[t, leaf][None, :]
    return pred


if __name__ == "__main__":
    # SoftGBM(num_trees=4, tree_depth=3, input_dim=16, shrinkage_rate=0.3, phi_numel=1)
    num_trees = 4
    tree_depth = 3
    input_dim = 16
    shrinkage_rate = 0.3
    phi_numel = 1
    batch = 8

    num_internal = 2 ** tree_depth - 1
    num_leaves = 2 ** tree_depth

    key = jax.random.PRNGKey(0)
    kx, kw, kb, kp = jax.random.split(key, 4)

    x = jax.random.normal(kx, (batch, input_dim), dtype=jnp.float32)
    bound = 1.0 / np.sqrt(input_dim)
    W = jax.random.uniform(kw, (num_trees, num_internal, input_dim),
                           dtype=jnp.float32, minval=-bound, maxval=bound)
    bias = jax.random.uniform(kb, (num_trees, 1, num_internal),
                              dtype=jnp.float32, minval=-bound, maxval=bound)
    phi = jax.random.normal(kp, (num_trees, num_leaves, phi_numel),
                            dtype=jnp.float32)

    ref = soft_gbm_reference(x, W, bias, phi, shrinkage_rate, tree_depth)

    # Tight numerical check on the f32 parameter path.
    out_f32 = soft_gbm_forward(x, W, bias, phi, shrinkage_rate, tree_depth,
                               param_dtype=jnp.float32)
    out_f32 = jax.block_until_ready(out_f32)
    np.testing.assert_allclose(np.asarray(out_f32), np.asarray(ref),
                               rtol=1e-4, atol=1e-5)

    # Default fast path: bf16 MXU operands, f32 accumulation / elementwise math.
    out_bf16 = soft_gbm_forward(x, W, bias, phi, shrinkage_rate, tree_depth)
    out_bf16 = jax.block_until_ready(out_bf16)
    np.testing.assert_allclose(np.asarray(out_bf16), np.asarray(ref),
                               rtol=5e-2, atol=3e-2)

    print("KERNEL_OK")
</pallas_src>

<mosaic_0001>
module attributes {stable_mosaic.version = 11 : i64} {
  func.func @_soft_gbm_kernel(%arg0: i32, %arg1: memref<8x16xf32, #tpu.memory_space<vmem>>, %arg2: memref<16x28xf32, #tpu.memory_space<vmem>>, %arg3: memref<1x28xf32, #tpu.memory_space<vmem>>, %arg4: memref<16x32xf32, #tpu.memory_space<vmem>>, %arg5: memref<1x32xf32, #tpu.memory_space<vmem>>, %arg6: memref<28x32xf32, #tpu.memory_space<vmem>>, %arg7: memref<32x128xf32, #tpu.memory_space<vmem>>, %arg8: memref<8x128xf32, #tpu.memory_space<vmem>>) attributes {dimension_semantics = [#tpu.dimension_semantics<parallel>], iteration_bounds = array<i64: 1>, scalar_prefetch = 0 : i64, scratch_operands = 0 : i64, tpu.core_type = #tpu.core_type<tc>, window_params = [{transform_indices = @transform_0, window_bounds = array<i64: 8, 16>}, {pipeline_mode = #tpu.pipeline_mode<synchronous>, transform_indices = @transform_1, window_bounds = array<i64: 16, 28>}, {pipeline_mode = #tpu.pipeline_mode<synchronous>, transform_indices = @transform_2, window_bounds = array<i64: 1, 28>}, {pipeline_mode = #tpu.pipeline_mode<synchronous>, transform_indices = @transform_3, window_bounds = array<i64: 16, 32>}, {pipeline_mode = #tpu.pipeline_mode<synchronous>, transform_indices = @transform_4, window_bounds = array<i64: 1, 32>}, {pipeline_mode = #tpu.pipeline_mode<synchronous>, transform_indices = @transform_5, window_bounds = array<i64: 28, 32>}, {pipeline_mode = #tpu.pipeline_mode<synchronous>, transform_indices = @transform_6, window_bounds = array<i64: 32, 128>}, {transform_indices = @transform_7, window_bounds = array<i64: 8, 128>}]} {
    %c0 = arith.constant 0 : index
    %c0_0 = arith.constant 0 : index
    %0 = vector.load %arg1[%c0, %c0_0] : memref<8x16xf32, #tpu.memory_space<vmem>>, vector<8x16xf32>
    %c0_1 = arith.constant 0 : index
    %c0_2 = arith.constant 0 : index
    %1 = vector.load %arg2[%c0_1, %c0_2] : memref<16x28xf32, #tpu.memory_space<vmem>>, vector<16x28xf32>
    %cst = arith.constant dense<0.000000e+00> : vector<8x28xf32>
    %2 = tpu.matmul %0, %1, %cst {dimension_numbers = #tpu.dot_dimension_numbers<[1], [0], [0], [1], [0, 0, 1, 1], [], []>} : vector<8x16xf32>, vector<16x28xf32>, vector<8x28xf32> -> vector<8x28xf32>
    %c0_3 = arith.constant 0 : index
    %c0_4 = arith.constant 0 : index
    %3 = vector.load %arg3[%c0_3, %c0_4] : memref<1x28xf32, #tpu.memory_space<vmem>>, vector<1x28xf32>
    %4 = vector.broadcast %3 : vector<1x28xf32> to vector<8x28xf32>
    %5 = arith.addf %2, %4 : vector<8x28xf32>
    %c0_5 = arith.constant 0 : index
    %c0_6 = arith.constant 0 : index
    %6 = vector.load %arg4[%c0_5, %c0_6] : memref<16x32xf32, #tpu.memory_space<vmem>>, vector<16x32xf32>
    %cst_7 = arith.constant dense<0.000000e+00> : vector<8x32xf32>
    %7 = tpu.matmul %0, %6, %cst_7 {dimension_numbers = #tpu.dot_dimension_numbers<[1], [0], [0], [1], [0, 0, 1, 1], [], []>} : vector<8x16xf32>, vector<16x32xf32>, vector<8x32xf32> -> vector<8x32xf32>
    %c0_8 = arith.constant 0 : index
    %c0_9 = arith.constant 0 : index
    %8 = vector.load %arg5[%c0_8, %c0_9] : memref<1x32xf32, #tpu.memory_space<vmem>>, vector<1x32xf32>
    %9 = vector.broadcast %8 : vector<1x32xf32> to vector<8x32xf32>
    %10 = arith.addf %7, %9 : vector<8x32xf32>
    %cst_10 = arith.constant 0.000000e+00 : f32
    %11 = vector.broadcast %cst_10 : f32 to vector<8x28xf32>
    %12 = arith.maximumf %5, %11 : vector<8x28xf32>
    %13 = math.absf %5 : vector<8x28xf32>
    %cst_11 = arith.constant 0.000000e+00 : f32
    %14 = vector.broadcast %cst_11 : f32 to vector<8x28xf32>
    %15 = arith.subf %14, %13 : vector<8x28xf32>
    %16 = math.exp %15 : vector<8x28xf32>
    %cst_12 = arith.constant 1.000000e+00 : f32
    %17 = vector.broadcast %cst_12 : f32 to vector<8x28xf32>
    %18 = arith.addf %17, %16 : vector<8x28xf32>
    %19 = math.log %18 : vector<8x28xf32>
    %20 = arith.addf %12, %19 : vector<8x28xf32>
    %c0_13 = arith.constant 0 : index
    %c0_14 = arith.constant 0 : index
    %21 = vector.load %arg6[%c0_13, %c0_14] : memref<28x32xf32, #tpu.memory_space<vmem>>, vector<28x32xf32>
    %cst_15 = arith.constant dense<0.000000e+00> : vector<8x32xf32>
    %22 = tpu.matmul %20, %21, %cst_15 {dimension_numbers = #tpu.dot_dimension_numbers<[1], [0], [0], [1], [0, 0, 1, 1], [], []>} : vector<8x28xf32>, vector<28x32xf32>, vector<8x32xf32> -> vector<8x32xf32>
    %23 = arith.subf %10, %22 : vector<8x32xf32>
    %24 = math.exp %23 : vector<8x32xf32>
    %c0_16 = arith.constant 0 : index
    %c0_17 = arith.constant 0 : index
    %25 = vector.load %arg7[%c0_16, %c0_17] : memref<32x128xf32, #tpu.memory_space<vmem>>, vector<32x128xf32>
    %cst_18 = arith.constant dense<0.000000e+00> : vector<8x128xf32>
    %26 = tpu.matmul %24, %25, %cst_18 {dimension_numbers = #tpu.dot_dimension_numbers<[1], [0], [0], [1], [0, 0, 1, 1], [], []>} : vector<8x32xf32>, vector<32x128xf32>, vector<8x128xf32> -> vector<8x128xf32>
    %cst_19 = arith.constant 3.000000e-01 : f32
    %27 = vector.broadcast %cst_19 : f32 to vector<8x128xf32>
    %28 = arith.mulf %27, %26 : vector<8x128xf32>
    %c0_20 = arith.constant 0 : index
    %c0_21 = arith.constant 0 : index
    %29 = vector.load %arg8[%c0_20, %c0_21] : memref<8x128xf32, #tpu.memory_space<vmem>>, vector<8x128xf32>
    tpu.vector_store %arg8[%c0_20, %c0_21], %28 {strides = array<i32>} : memref<8x128xf32, #tpu.memory_space<vmem>>, vector<8x128xf32>,
    return
  }
  func.func @transform_0(%arg0: i32) -> (i32, i32) {
    %c0_i32 = arith.constant 0 : i32
    %c0_i32_0 = arith.constant 0 : i32
    return %arg0, %c0_i32 : i32, i32
  }
  func.func @transform_1(%arg0: i32) -> (i32, i32) {
    %c0_i32 = arith.constant 0 : i32
    %c0_i32_0 = arith.constant 0 : i32
    %c0_i32_1 = arith.constant 0 : i32
    return %c0_i32, %c0_i32_0 : i32, i32
  }
  func.func @transform_2(%arg0: i32) -> (i32, i32) {
    %c0_i32 = arith.constant 0 : i32
    %c0_i32_0 = arith.constant 0 : i32
    %c0_i32_1 = arith.constant 0 : i32
    return %c0_i32, %c0_i32_0 : i32, i32
  }
  func.func @transform_3(%arg0: i32) -> (i32, i32) {
    %c0_i32 = arith.constant 0 : i32
    %c0_i32_0 = arith.constant 0 : i32
    %c0_i32_1 = arith.constant 0 : i32
    return %c0_i32, %c0_i32_0 : i32, i32
  }
  func.func @transform_4(%arg0: i32) -> (i32, i32) {
    %c0_i32 = arith.constant 0 : i32
    %c0_i32_0 = arith.constant 0 : i32
    %c0_i32_1 = arith.constant 0 : i32
    return %c0_i32, %c0_i32_0 : i32, i32
  }
  func.func @transform_5(%arg0: i32) -> (i32, i32) {
    %c0_i32 = arith.constant 0 : i32
    %c0_i32_0 = arith.constant 0 : i32
    %c0_i32_1 = arith.constant 0 : i32
    return %c0_i32, %c0_i32_0 : i32, i32
  }
  func.func @transform_6(%arg0: i32) -> (i32, i32) {
    %c0_i32 = arith.constant 0 : i32
    %c0_i32_0 = arith.constant 0 : i32
    %c0_i32_1 = arith.constant 0 : i32
    return %c0_i32, %c0_i32_0 : i32, i32
  }
  func.func @transform_7(%arg0: i32) -> (i32, i32) {
    %c0_i32 = arith.constant 0 : i32
    %c0_i32_0 = arith.constant 0 : i32
    return %arg0, %c0_i32 : i32, i32
  }
}

</mosaic_0001>

<llo_original>
// kernel: tpu_custom_call.1
$region0: #{tpu_custom_call.1}
  #allocation0 [shape = 'u32[]', space=smem, size = 0x4, offset = 0x4, fixed_abs, tag = 'smem constant byte address 0x4 - core index']
  #allocation1 [shape = 'u32[144,128]{1,0:T(1,128)}', space=vmem, size = 0x12000, scoped, tag = 'internal scratch']
  %s0 = inlined_call_operand.hbm [shape: f32[8,16], index: 0, kind: input, shape index: {}]
  %s1 = inlined_call_operand.hbm [shape: f32[16,28], index: 1, kind: input, shape index: {}]
  %s2 = inlined_call_operand.vmem [shape: f32[1,28], index: 2, kind: input, shape index: {}]
  %s3 = inlined_call_operand.hbm [shape: f32[16,32], index: 3, kind: input, shape index: {}]
  %s4 = inlined_call_operand.vmem [shape: f32[1,32], index: 4, kind: input, shape index: {}]
  %s5 = inlined_call_operand.hbm [shape: f32[28,32], index: 5, kind: input, shape index: {}]
  %s6 = inlined_call_operand.hbm [shape: f32[32,128], index: 6, kind: input, shape index: {}]
  %s7 = inlined_call_operand.hbm [shape: f32[8,128], index: 7, kind: output, shape index: {}]
  %s8 = sld [smem:[#allocation0]]
  $region58: #{tpu_custom_call.1} parent=0
    _
  %s10 = ssub.s32 1, %s8
  %s11 = scalar_select 0, %s10, %s8
  $region1: #{tpu_custom_call.1} parent=0
    #allocation2 [shape = 'u8[4096]{0}', space=vmem, size = 0x1000, scoped, tag = 'input window, operand 0, single buffered']
    #allocation3 [shape = 's32[1]{0}', space=sflag, size = 0x4, scoped, tag = 'scoped memory for tpu_custom_call.1']
    #allocation4 [shape = 's32[1]{0}', space=sflag, size = 0x4, scoped, tag = 'scoped memory for tpu_custom_call.1']
    #allocation5 [shape = 'u8[8192]{0}', space=vmem, size = 0x2000, scoped, tag = 'input window, operand 1, single buffered']
    #allocation6 [shape = 's32[1]{0}', space=sflag, size = 0x4, scoped, tag = 'scoped memory for tpu_custom_call.1']
    #allocation7 [shape = 'u8[8192]{0}', space=vmem, size = 0x2000, scoped, tag = 'input window, operand 3, single buffered']
    #allocation8 [shape = 'u8[16384]{0}', space=vmem, size = 0x4000, scoped, tag = 'input window, operand 5, single buffered']
    #allocation9 [shape = 's32[1]{0}', space=sflag, size = 0x4, scoped, tag = 'scoped memory for tpu_custom_call.1']
    #allocation10 [shape = 'u8[16384]{0}', space=vmem, size = 0x4000, scoped, tag = 'input window, operand 6, single buffered']
    #allocation11 [shape = 'u8[4096]{0}', space=vmem, size = 0x1000, scoped, tag = 'output window, operand 0, single buffered']
    %12 = vsyncpa [#allocation3], 0
    %13 = vsyncpa [#allocation6], 0
    %14 = vsyncpa [#allocation9], 0
    %15 = vsyncpa [#allocation4], 0
    // Predicated region
    $region2: #{tpu_custom_call.1} parent=1 // pred_check
      _
    $region3: #{tpu_custom_call.1} parent=1 // pred_check_branch
      %17 = sbr.rel (0) target = $region5
    $region4: #{tpu_custom_call.1} parent=1 // pred_region
      %s19 = ssub.s32 128, 128
      %20 = vsyncadd [#allocation3], %s19
      %s22 = sshll.u32 [#allocation2], 4
      %s23 = int_to_ptr.vmem [resolvable:$true] %s22
      %25 = dma.hbm_to_vmem [thread:$0]  %s0, 128, %s23, [#allocation3]
    $region5: #{tpu_custom_call.1} parent=1 // pred_fallthru
      _
    // Predicated region
    $region6: #{tpu_custom_call.1} parent=1 // pred_check
      _
    $region7: #{tpu_custom_call.1} parent=1 // pred_check_branch
      %27 = sbr.rel (0) target = $region9
    $region8: #{tpu_custom_call.1} parent=1 // pred_region
      %s29 = ssub.s32 256, 256
      %30 = vsyncadd [#allocation6], %s29
      %s31 = sshll.u32 [#allocation5], 4
      %s32 = int_to_ptr.vmem [resolvable:$true] %s31
      %37 = dma.hbm_to_vmem [thread:$0]  %s1, 256, %s32, [#allocation6], 128, 128, 8
    $region9: #{tpu_custom_call.1} parent=1 // pred_fallthru
      _
    // Predicated region
    $region10: #{tpu_custom_call.1} parent=1 // pred_check
      _
    $region11: #{tpu_custom_call.1} parent=1 // pred_check_branch
      %39 = sbr.rel (0) target = $region13
    $region12: #{tpu_custom_call.1} parent=1 // pred_region
      _
    $region13: #{tpu_custom_call.1} parent=1 // pred_fallthru
      _
    // Predicated region
    $region14: #{tpu_custom_call.1} parent=1 // pred_check
      _
    $region15: #{tpu_custom_call.1} parent=1 // pred_check_branch
      %41 = sbr.rel (0) target = $region17
    $region16: #{tpu_custom_call.1} parent=1 // pred_region
      %s43 = ssub.s32 256, 256
      %44 = vsyncadd [#allocation6], %s43
      %s45 = sshll.u32 [#allocation7], 4
      %s46 = int_to_ptr.vmem [resolvable:$true] %s45
      %51 = dma.hbm_to_vmem [thread:$0]  %s3, 256, %s46, [#allocation6], 128, 128, 8
    $region17: #{tpu_custom_call.1} parent=1 // pred_fallthru
      _
    // Predicated region
    $region18: #{tpu_custom_call.1} parent=1 // pred_check
      _
    $region19: #{tpu_custom_call.1} parent=1 // pred_check_branch
      %53 = sbr.rel (0) target = $region21
    $region20: #{tpu_custom_call.1} parent=1 // pred_region
      _
    $region21: #{tpu_custom_call.1} parent=1 // pred_fallthru
      _
    // Predicated region
    $region22: #{tpu_custom_call.1} parent=1 // pred_check
      _
    $region23: #{tpu_custom_call.1} parent=1 // pred_check_branch
      %55 = sbr.rel (0) target = $region25
    $region24: #{tpu_custom_call.1} parent=1 // pred_region
      %s57 = ssub.s32 512, 512
      %58 = vsyncadd [#allocation9], %s57
      %s59 = sshll.u32 [#allocation8], 4
      %s60 = int_to_ptr.vmem [resolvable:$true] %s59
      %65 = dma.hbm_to_vmem [thread:$0]  %s5, 512, %s60, [#allocation9], 128, 128, 8
    $region25: #{tpu_custom_call.1} parent=1 // pred_fallthru
      _
    // Predicated region
    $region26: #{tpu_custom_call.1} parent=1 // pred_check
      _
    $region27: #{tpu_custom_call.1} parent=1 // pred_check_branch
      %67 = sbr.rel (0) target = $region29
    $region28: #{tpu_custom_call.1} parent=1 // pred_region
      %s69 = ssub.s32 512, 512
      %70 = vsyncadd [#allocation9], %s69
      %s71 = sshll.u32 [#allocation10], 4
      %s72 = int_to_ptr.vmem [resolvable:$true] %s71
      %77 = dma.hbm_to_vmem [thread:$0]  %s6, 512, %s72, [#allocation9], 128, 128, 8
    $region29: #{tpu_custom_call.1} parent=1 // pred_fallthru
      _
    // Predicated region
    $region30: #{tpu_custom_call.1} parent=1 // pred_check
      _
    $region31: #{tpu_custom_call.1} parent=1 // pred_check_branch
      %79 = sbr.rel (0) target = $region33
    $region32: #{tpu_custom_call.1} parent=1 // pred_region
      %80 = dma.done [#allocation3], 128
    $region33: #{tpu_custom_call.1} parent=1 // pred_fallthru
      _
    // Predicated region
    $region34: #{tpu_custom_call.1} parent=1 // pred_check
      _
    $region35: #{tpu_custom_call.1} parent=1 // pred_check_branch
      %82 = sbr.rel (0) target = $region37
    $region36: #{tpu_custom_call.1} parent=1 // pred_region
      %83 = dma.done [#allocation6], 256
    $region37: #{tpu_custom_call.1} parent=1 // pred_fallthru
      _
    // Predicated region
    $region38: #{tpu_custom_call.1} parent=1 // pred_check
      _
    $region39: #{tpu_custom_call.1} parent=1 // pred_check_branch
      %85 = sbr.rel (0) target = $region41
    $region40: #{tpu_custom_call.1} parent=1 // pred_region
      %86 = dma.done [#allocation6], 256
    $region41: #{tpu_custom_call.1} parent=1 // pred_fallthru
      _
    // Predicated region
    $region42: #{tpu_custom_call.1} parent=1 // pred_check
      _
    $region43: #{tpu_custom_call.1} parent=1 // pred_check_branch
      %88 = sbr.rel (0) target = $region45
    $region44: #{tpu_custom_call.1} parent=1 // pred_region
      %89 = dma.done [#allocation9], 512
    $region45: #{tpu_custom_call.1} parent=1 // pred_fallthru
      _
    // Predicated region
    $region46: #{tpu_custom_call.1} parent=1 // pred_check
      _
    $region47: #{tpu_custom_call.1} parent=1 // pred_check_branch
      %91 = sbr.rel (0) target = $region49
    $region48: #{tpu_custom_call.1} parent=1 // pred_region
      %92 = dma.done [#allocation9], 512
    $region49: #{tpu_custom_call.1} parent=1 // pred_fallthru
      _
    %v93 = vld [vmem:[#allocation2] sm:$0xff]
    %v94 = vld [vmem:[#allocation5] sm:$0xff]
    %v95 = vld [vmem:[#allocation5 + $0x8] sm:$0xff]
    %v96 = vld [vmem:[%s2] sm:$0x1]
    %v98 = vlaneseq
    %v99 = vshrl.u32 %v98, 7
    %v100 = vsub.s32 0, %v99
    %v101 = vrot.slane %v96, %v100
    %vm103 = vcmask 130048
    %v105 = vsel %vm103, %v93, 0
    %107 = vmatprep.subr.mxu0 0.0
    %108 = vmatpush1.msra.mxu0 %v94
    %109 = vmatprep.subr.mxu0 0.0
    %110 = vmatpush1.msra.mxu0 %v95
    %111 = vmatprep.subr.mxu0 0.0
    %112 = vmatpush1.msra.mxu0 0.0
    %113 = vmatprep.subr.mxu0 0.0
    %114 = vmatpush1.msra.mxu0 0.0
    %115 = vmatprep.subr.mxu0 0.0
    %116 = vmatpush1.msra.mxu0 0.0
    %117 = vmatprep.subr.mxu0 0.0
    %118 = vmatpush1.msra.mxu0 0.0
    %119 = vmatprep.subr.mxu0 0.0
    %120 = vmatpush1.msra.mxu0 0.0
    %121 = vmatprep.subr.mxu0 0.0
    %122 = vmatpush1.msra.mxu0 0.0
    %123 = vmatprep.subr.mxu0 0.0
    %124 = vmatpush1.msra.mxu0 0.0
    %125 = vmatprep.subr.mxu0 0.0
    %126 = vmatpush1.msra.mxu0 0.0
    %127 = vmatprep.subr.mxu0 0.0
    %128 = vmatpush1.msra.mxu0 0.0
    %129 = vmatprep.subr.mxu0 0.0
    %130 = vmatpush1.msra.mxu0 0.0
    %131 = vmatprep.subr.mxu0 0.0
    %132 = vmatpush1.msra.mxu0 0.0
    %133 = vmatprep.subr.mxu0 0.0
    %134 = vmatpush1.msra.mxu0 0.0
    %135 = vmatprep.subr.mxu0 0.0
    %136 = vmatpush1.msra.mxu0 0.0
    %137 = vmatprep.subr.mxu0 0.0
    %138 = vmatpush1.msra.mxu0 0.0
    %139 = vmatprep.subr.mxu0 0.0
    %140 = vmatpush1.msra.mxu0 0.0
    %141 = vmatprep.subr.mxu0 0.0
    %142 = vmatpush1.msra.mxu0 0.0
    %143 = vmatprep.subr.mxu0 0.0
    %144 = vmatpush1.msra.mxu0 0.0
    %145 = vmatprep.subr.mxu0 0.0
    %146 = vmatpush1.msra.mxu0 0.0
    %147 = vmatprep.subr.mxu0 0.0
    %148 = vmatpush1.msra.mxu0 0.0
    %149 = vmatprep.subr.mxu0 0.0
    %150 = vmatpush1.msra.mxu0 0.0
    %151 = vmatprep.subr.mxu0 0.0
    %152 = vmatpush1.msra.mxu0 0.0
    %153 = vmatprep.subr.mxu0 0.0
    %154 = vmatpush1.msra.mxu0 0.0
    %155 = vmatprep.subr.mxu0 0.0
    %156 = vmatpush1.msra.mxu0 0.0
    %157 = vmatprep.subr.mxu0 0.0
    %158 = vmatpush1.msra.mxu0 0.0
    %159 = vmatprep.subr.mxu0 0.0
    %160 = vmatpush1.msra.mxu0 0.0
    %161 = vmatprep.subr.mxu0 0.0
    %162 = vmatpush1.msra.mxu0 0.0
    %163 = vmatprep.subr.mxu0 0.0
    %164 = vmatpush1.msra.mxu0 0.0
    %165 = vmatprep.subr.mxu0 0.0
    %166 = vmatpush1.msra.mxu0 0.0
    %167 = vmatprep.subr.mxu0 0.0
    %168 = vmatpush1.msra.mxu0 0.0
    %169 = vmatprep.subr.mxu0 0.0
    %170 = vmatpush1.msra.mxu0 0.0
    %171 = vmatprep.mubr.f32.mxu0 0.0
    %172 = vmatmul.mubr.f32.gmra.mrb[0].mxu0 %v105
    %v173 = vpop.f32.mrb[0].mxu0
    %v174 = vadd.f32 %v101, %v173
    %v175 = vpop.f32.mrb[0].mxu0
    %176 = vdwg.mxu0
    %v177 = vld [vmem:[#allocation7] sm:$0xff]
    %v178 = vld [vmem:[#allocation7 + $0x8] sm:$0xff]
    %v179 = vld [vmem:[%s4] sm:$0x1]
    %v181 = vlaneseq
    %v182 = vshrl.u32 %v181, 7
    %v183 = vsub.s32 0, %v182
    %v184 = vrot.slane %v179, %v183
    %186 = vmatprep.subr.mxu0 0.0
    %187 = vmatpush1.msra.mxu0 %v177
    %188 = vmatprep.subr.mxu0 0.0
    %189 = vmatpush1.msra.mxu0 %v178
    %190 = vmatprep.subr.mxu0 0.0
    %191 = vmatpush1.msra.mxu0 0.0
    %192 = vmatprep.subr.mxu0 0.0
    %193 = vmatpush1.msra.mxu0 0.0
    %194 = vmatprep.subr.mxu0 0.0
    %195 = vmatpush1.msra.mxu0 0.0
    %196 = vmatprep.subr.mxu0 0.0
    %197 = vmatpush1.msra.mxu0 0.0
    %198 = vmatprep.subr.mxu0 0.0
    %199 = vmatpush1.msra.mxu0 0.0
    %200 = vmatprep.subr.mxu0 0.0
    %201 = vmatpush1.msra.mxu0 0.0
    %202 = vmatprep.subr.mxu0 0.0
    %203 = vmatpush1.msra.mxu0 0.0
    %204 = vmatprep.subr.mxu0 0.0
    %205 = vmatpush1.msra.mxu0 0.0
    %206 = vmatprep.subr.mxu0 0.0
    %207 = vmatpush1.msra.mxu0 0.0
    %208 = vmatprep.subr.mxu0 0.0
    %209 = vmatpush1.msra.mxu0 0.0
    %210 = vmatprep.subr.mxu0 0.0
    %211 = vmatpush1.msra.mxu0 0.0
    %212 = vmatprep.subr.mxu0 0.0
    %213 = vmatpush1.msra.mxu0 0.0
    %214 = vmatprep.subr.mxu0 0.0
    %215 = vmatpush1.msra.mxu0 0.0
    %216 = vmatprep.subr.mxu0 0.0
    %217 = vmatpush1.msra.mxu0 0.0
    %218 = vmatprep.subr.mxu0 0.0
    %219 = vmatpush1.msra.mxu0 0.0
    %220 = vmatprep.subr.mxu0 0.0
    %221 = vmatpush1.msra.mxu0 0.0
    %222 = vmatprep.subr.mxu0 0.0
    %223 = vmatpush1.msra.mxu0 0.0
    %224 = vmatprep.subr.mxu0 0.0
    %225 = vmatpush1.msra.mxu0 0.0
    %226 = vmatprep.subr.mxu0 0.0
    %227 = vmatpush1.msra.mxu0 0.0
    %228 = vmatprep.subr.mxu0 0.0
    %229 = vmatpush1.msra.mxu0 0.0
    %230 = vmatprep.subr.mxu0 0.0
    %231 = vmatpush1.msra.mxu0 0.0
    %232 = vmatprep.subr.mxu0 0.0
    %233 = vmatpush1.msra.mxu0 0.0
    %234 = vmatprep.subr.mxu0 0.0
    %235 = vmatpush1.msra.mxu0 0.0
    %236 = vmatprep.subr.mxu0 0.0
    %237 = vmatpush1.msra.mxu0 0.0
    %238 = vmatprep.subr.mxu0 0.0
    %239 = vmatpush1.msra.mxu0 0.0
    %240 = vmatprep.subr.mxu0 0.0
    %241 = vmatpush1.msra.mxu0 0.0
    %242 = vmatprep.subr.mxu0 0.0
    %243 = vmatpush1.msra.mxu0 0.0
    %244 = vmatprep.subr.mxu0 0.0
    %245 = vmatpush1.msra.mxu0 0.0
    %246 = vmatprep.subr.mxu0 0.0
    %247 = vmatpush1.msra.mxu0 0.0
    %248 = vmatprep.subr.mxu0 0.0
    %249 = vmatpush1.msra.mxu0 0.0
    %250 = vmatprep.mubr.f32.mxu0 0.0
    %251 = vmatmul.mubr.f32.gmra.mrb[0].mxu0 %v105
    %v252 = vpop.f32.mrb[0].mxu0
    %v253 = vadd.f32 %v184, %v252
    %v254 = vpop.f32.mrb[0].mxu0
    %255 = vdwg.mxu0
    %v256 = vmax.f32 %v174, 0.0
    %v257 = vand.u32 2147483647, %v174
    %v258 = vsub.f32 0.0, %v257
    %v259 = vmul.f32 %v258, 1.442695
    %v260 = vpow.pop %v259
    %v261 = vadd.f32 %v260, 1.0
    %v262 = vlog2.pop %v261
    %v263 = vmul.f32 %v262, 0.6931472
    %v264 = vadd.f32 %v256, %v263
    %v265 = vld [vmem:[#allocation8] sm:$0xff]
    %v266 = vld [vmem:[#allocation8 + $0x8] sm:$0xff]
    %v267 = vld [vmem:[#allocation8 + $0x10] sm:$0xff]
    %v268 = vld [vmem:[#allocation8 + $0x18] sm:$0xf]
    %vm269 = vcmask 228352
    %v271 = vsel %vm269, %v264, 0
    %vm273 = vcmask 1043456
    %v275 = vsel %vm273, %v268, 0
    %277 = vmatprep.subr.mxu0 0.0
    %278 = vmatpush1.msra.mxu0 %v265
    %279 = vmatprep.subr.mxu0 0.0
    %280 = vmatpush1.msra.mxu0 %v266
    %281 = vmatprep.subr.mxu0 0.0
    %282 = vmatpush1.msra.mxu0 %v267
    %283 = vmatprep.subr.mxu0 0.0
    %284 = vmatpush1.msra.mxu0 %v275
    %285 = vmatprep.subr.mxu0 0.0
    %286 = vmatpush1.msra.mxu0 0.0
    %287 = vmatprep.subr.mxu0 0.0
    %288 = vmatpush1.msra.mxu0 0.0
    %289 = vmatprep.subr.mxu0 0.0
    %290 = vmatpush1.msra.mxu0 0.0
    %291 = vmatprep.subr.mxu0 0.0
    %292 = vmatpush1.msra.mxu0 0.0
    %293 = vmatprep.subr.mxu0 0.0
    %294 = vmatpush1.msra.mxu0 0.0
    %295 = vmatprep.subr.mxu0 0.0
    %296 = vmatpush1.msra.mxu0 0.0
    %297 = vmatprep.subr.mxu0 0.0
    %298 = vmatpush1.msra.mxu0 0.0
    %299 = vmatprep.subr.mxu0 0.0
    %300 = vmatpush1.msra.mxu0 0.0
    %301 = vmatprep.subr.mxu0 0.0
    %302 = vmatpush1.msra.mxu0 0.0
    %303 = vmatprep.subr.mxu0 0.0
    %304 = vmatpush1.msra.mxu0 0.0
    %305 = vmatprep.subr.mxu0 0.0
    %306 = vmatpush1.msra.mxu0 0.0
    %307 = vmatprep.subr.mxu0 0.0
    %308 = vmatpush1.msra.mxu0 0.0
    %309 = vmatprep.subr.mxu0 0.0
    %310 = vmatpush1.msra.mxu0 0.0
    %311 = vmatprep.subr.mxu0 0.0
    %312 = vmatpush1.msra.mxu0 0.0
    %313 = vmatprep.subr.mxu0 0.0
    %314 = vmatpush1.msra.mxu0 0.0
    %315 = vmatprep.subr.mxu0 0.0
    %316 = vmatpush1.msra.mxu0 0.0
    %317 = vmatprep.subr.mxu0 0.0
    %318 = vmatpush1.msra.mxu0 0.0
    %319 = vmatprep.subr.mxu0 0.0
    %320 = vmatpush1.msra.mxu0 0.0
    %321 = vmatprep.subr.mxu0 0.0
    %322 = vmatpush1.msra.mxu0 0.0
    %323 = vmatprep.subr.mxu0 0.0
    %324 = vmatpush1.msra.mxu0 0.0
    %325 = vmatprep.subr.mxu0 0.0
    %326 = vmatpush1.msra.mxu0 0.0
    %327 = vmatprep.subr.mxu0 0.0
    %328 = vmatpush1.msra.mxu0 0.0
    %329 = vmatprep.subr.mxu0 0.0
    %330 = vmatpush1.msra.mxu0 0.0
    %331 = vmatprep.subr.mxu0 0.0
    %332 = vmatpush1.msra.mxu0 0.0
    %333 = vmatprep.subr.mxu0 0.0
    %334 = vmatpush1.msra.mxu0 0.0
    %335 = vmatprep.subr.mxu0 0.0
    %336 = vmatpush1.msra.mxu0 0.0
    %337 = vmatprep.subr.mxu0 0.0
    %338 = vmatpush1.msra.mxu0 0.0
    %339 = vmatprep.subr.mxu0 0.0
    %340 = vmatpush1.msra.mxu0 0.0
    %341 = vmatprep.mubr.f32.mxu0 0.0
    %342 = vmatmul.mubr.f32.gmra.mrb[0].mxu0 %v271
    %v343 = vpop.f32.mrb[0].mxu0
    %v344 = vadd.f32 0.0, %v343
    %v345 = vpop.f32.mrb[0].mxu0
    %346 = vdwg.mxu0
    %v347 = vsub.f32 %v253, %v344
    %v348 = vmul.f32 %v347, 1.442695
    %v349 = vpow.pop %v348
    %v350 = vld [vmem:[#allocation10] sm:$0xff]
    %v351 = vld [vmem:[#allocation10 + $0x8] sm:$0xff]
    %v352 = vld [vmem:[#allocation10 + $0x10] sm:$0xff]
    %v353 = vld [vmem:[#allocation10 + $0x18] sm:$0xff]
    %vm354 = vcmask 261120
    %v356 = vsel %vm354, %v349, 0
    %358 = vmatprep.subr.mxu0 0.0
    %359 = vmatpush1.msra.mxu0 %v350
    %360 = vmatprep.subr.mxu0 0.0
    %361 = vmatpush1.msra.mxu0 %v351
    %362 = vmatprep.subr.mxu0 0.0
    %363 = vmatpush1.msra.mxu0 %v352
    %364 = vmatprep.subr.mxu0 0.0
    %365 = vmatpush1.msra.mxu0 %v353
    %366 = vmatprep.subr.mxu0 0.0
    %367 = vmatpush1.msra.mxu0 0.0
    %368 = vmatprep.subr.mxu0 0.0
    %369 = vmatpush1.msra.mxu0 0.0
    %370 = vmatprep.subr.mxu0 0.0
    %371 = vmatpush1.msra.mxu0 0.0
    %372 = vmatprep.subr.mxu0 0.0
    %373 = vmatpush1.msra.mxu0 0.0
    %374 = vmatprep.subr.mxu0 0.0
    %375 = vmatpush1.msra.mxu0 0.0
    %376 = vmatprep.subr.mxu0 0.0
    %377 = vmatpush1.msra.mxu0 0.0
    %378 = vmatprep.subr.mxu0 0.0
    %379 = vmatpush1.msra.mxu0 0.0
    %380 = vmatprep.subr.mxu0 0.0
    %381 = vmatpush1.msra.mxu0 0.0
    %382 = vmatprep.subr.mxu0 0.0
    %383 = vmatpush1.msra.mxu0 0.0
    %384 = vmatprep.subr.mxu0 0.0
    %385 = vmatpush1.msra.mxu0 0.0
    %386 = vmatprep.subr.mxu0 0.0
    %387 = vmatpush1.msra.mxu0 0.0
    %388 = vmatprep.subr.mxu0 0.0
    %389 = vmatpush1.msra.mxu0 0.0
    %390 = vmatprep.subr.mxu0 0.0
    %391 = vmatpush1.msra.mxu0 0.0
    %392 = vmatprep.subr.mxu0 0.0
    %393 = vmatpush1.msra.mxu0 0.0
    %394 = vmatprep.subr.mxu0 0.0
    %395 = vmatpush1.msra.mxu0 0.0
    %396 = vmatprep.subr.mxu0 0.0
    %397 = vmatpush1.msra.mxu0 0.0
    %398 = vmatprep.subr.mxu0 0.0
    %399 = vmatpush1.msra.mxu0 0.0
    %400 = vmatprep.subr.mxu0 0.0
    %401 = vmatpush1.msra.mxu0 0.0
    %402 = vmatprep.subr.mxu0 0.0
    %403 = vmatpush1.msra.mxu0 0.0
    %404 = vmatprep.subr.mxu0 0.0
    %405 = vmatpush1.msra.mxu0 0.0
    %406 = vmatprep.subr.mxu0 0.0
    %407 = vmatpush1.msra.mxu0 0.0
    %408 = vmatprep.subr.mxu0 0.0
    %409 = vmatpush1.msra.mxu0 0.0
    %410 = vmatprep.subr.mxu0 0.0
    %411 = vmatpush1.msra.mxu0 0.0
    %412 = vmatprep.subr.mxu0 0.0
    %413 = vmatpush1.msra.mxu0 0.0
    %414 = vmatprep.subr.mxu0 0.0
    %415 = vmatpush1.msra.mxu0 0.0
    %416 = vmatprep.subr.mxu0 0.0
    %417 = vmatpush1.msra.mxu0 0.0
    %418 = vmatprep.subr.mxu0 0.0
    %419 = vmatpush1.msra.mxu0 0.0
    %420 = vmatprep.subr.mxu0 0.0
    %421 = vmatpush1.msra.mxu0 0.0
    %422 = vmatprep.mubr.f32.mxu0 0.0
    %423 = vmatmul.mubr.f32.gmra.mrb[0].mxu0 %v356
    %v424 = vpop.f32.mrb[0].mxu0
    %v425 = vadd.f32 0.0, %v424
    %v426 = vpop.f32.mrb[0].mxu0
    %427 = vdwg.mxu0
    %v428 = vmul.f32 %v425, 0.3
    %429 = vst [vmem:[#allocation11] sm:$0xff] %v428
    // Predicated region
    $region50: #{tpu_custom_call.1} parent=1 // pred_check
      _
    $region51: #{tpu_custom_call.1} parent=1 // pred_check_branch
      %431 = sbr.rel (0) target = $region53
    $region52: #{tpu_custom_call.1} parent=1 // pred_region
      %s433 = ssub.s32 128, 128
      %434 = vsyncadd [#allocation4], %s433
      %s436 = sshll.u32 [#allocation11], 4
      %s437 = int_to_ptr.vmem [resolvable:$true] %s436
      %439 = dma.vmem_to_hbm [thread:$0]  %s437, 128, %s7, [#allocation4]
    $region53: #{tpu_custom_call.1} parent=1 // pred_fallthru
      _
    // Predicated region
    $region54: #{tpu_custom_call.1} parent=1 // pred_check
      _
    $region55: #{tpu_custom_call.1} parent=1 // pred_check_branch
      %441 = sbr.rel (0) target = $region57
    $region56: #{tpu_custom_call.1} parent=1 // pred_region
      %442 = dma.done [#allocation4], 128
    $region57: #{tpu_custom_call.1} parent=1 // pred_fallthru
      _
    %443 = vsyncpa [#allocation3], 1
    %444 = vsyncpa [#allocation6], 1
    %445 = vsyncpa [#allocation9], 1
    %446 = vsyncpa [#allocation4], 1

</llo_original>
